<compile_context>
chip_gen: v5e
topology: v5e:2x2
jax: 0.10.0
libtpu: 0.0.40
codegen_flags: <defaults>
</compile_context>

<pallas_src>
import jax
import jax.numpy as jnp
from jax.experimental import pallas as pl
from jax.experimental.pallas import tpu as pltpu


def _round_up(n, m):
    return (n + m - 1) // m * m


def _largest_divisor_leq(m, limit):
    limit = max(1, min(m, int(limit)))
    for d in range(limit, 0, -1):
        if m % d == 0:
            return d
    return 1


def _vmem_cap_bytes():
    """Generation-aware VMEM budget: v5e/v6e have 128 MiB physical, v7x only 64 MiB."""
    try:
        cap = int(pltpu.get_tpu_info().vmem_capacity_bytes)
    except Exception:
        cap = 64 << 20
    if cap >= (100 << 20):      # v5e / v6e
        return 96 << 20
    return 48 << 20             # v7x (or unknown): stay conservative


def cls_kernel(x_ref, w1_ref, b1_ref, w2_ref, b2_ref, logp_ref, emb_ref):
    # fc + ReLU: bf16 MXU matmuls with f32 accumulation; bias/ReLU/softmax in f32 (VPU/EUP).
    x = x_ref[...]
    if x.dtype != jnp.bfloat16:
        x = x.astype(jnp.bfloat16)
    h = jnp.dot(x, w1_ref[...], preferred_element_type=jnp.float32)        # (bm, Hp) f32
    h = jnp.maximum(h + b1_ref[...], 0.0)
    logits = jnp.dot(h.astype(jnp.bfloat16), w2_ref[...],
                     preferred_element_type=jnp.float32) + b2_ref[...]     # (bm, Kp) f32
    # log_softmax over classes (torch dim=1); padded class columns carry a -1e30 bias so
    # exp() underflows to 0 and they never perturb max / logsumexp (f32 throughout).
    m = jnp.max(logits, axis=-1, keepdims=True)
    shifted = logits - m
    lse = jnp.log(jnp.sum(jnp.exp(shifted), axis=-1, keepdims=True))
    logp_ref[...] = (shifted - lse).astype(logp_ref.dtype)
    emb_ref[...] = h.astype(emb_ref.dtype)


def prepare_cls_params(w1, b1, w2, b2):
    """One-time weight prep: pad H/K up to lane-dense multiples of 128, cast to bf16.

    Hoisted out of the per-call path so weight-stationary inference does not pay the
    pad/cast read+write of both weight matrices on every forward.
    """
    D, H = w1.shape
    K = w2.shape[1]
    Hp = _round_up(H, 128)
    Kp = _round_up(K, 128)
    NEG = jnp.float32(-1e30)
    w1p = jnp.zeros((D, Hp), jnp.bfloat16).at[:, :H].set(w1.astype(jnp.bfloat16))
    b1p = jnp.zeros((1, Hp), jnp.float32).at[:, :H].set(
        b1.reshape(1, -1).astype(jnp.float32))
    w2p = jnp.zeros((Hp, Kp), jnp.bfloat16).at[:H, :K].set(w2.astype(jnp.bfloat16))
    b2p = jnp.full((1, Kp), NEG, jnp.float32).at[:, :K].set(
        b2.reshape(1, -1).astype(jnp.float32))
    return {"w1p": w1p, "b1p": b1p, "w2p": w2p, "b2p": b2p,
            "D": D, "H": H, "K": K, "Hp": Hp, "Kp": Kp}


def cls_forward(x, params, *, block_b=1024, emb_dtype=jnp.bfloat16):
    """Pallas forward of CLS. Returns (log_probs (B, K) f32, embedding (B, H) emb_dtype).

    Note: matmuls use bf16 inputs with f32 accumulation and (by default) a bf16
    embedding output; this deviates from the torch f32 reference by ~1e-3 relative.
    """
    B, D = x.shape
    assert D == params["D"], "embed_dim mismatch between x and prepared params"
    H, K, Hp, Kp = params["H"], params["K"], params["Hp"], params["Kp"]
    w1p, b1p, w2p, b2p = params["w1p"], params["b1p"], params["w2p"], params["b2p"]

    # Stream x in its own dtype: bf16 passes through (half DMA / VMEM); anything else
    # stays f32 -- no standalone wrapper cast (that would be a full extra HBM round trip).
    xs = x if x.dtype == jnp.bfloat16 else x.astype(jnp.float32)
    x_itemsize = jnp.dtype(xs.dtype).itemsize
    emb_itemsize = jnp.dtype(emb_dtype).itemsize

    def vmem_bytes(bb):
        # resident weights/biases: single-buffered (constant index map)
        w_bytes = D * Hp * 2 + Hp * Kp * 2 + Hp * 4 + Kp * 4
        # streamed input / output tiles: double-buffered by the pipeline
        io_bytes = 2 * bb * (D * x_itemsize + Kp * 4 + Hp * emb_itemsize)
        # in-kernel live temporaries: bf16 x copy, f32 h + bf16 h, logits/shifted/exp
        tmp_bytes = bb * (D * 2 + Hp * 4 + Hp * 2 + 2 * Kp * 4)
        return w_bytes + io_bytes + tmp_bytes

    cap = _vmem_cap_bytes()
    budget = (3 * cap) // 4

    # TODO(synk): for vocab-sized K the resident W2 (Hp x Kp bf16) can exceed v7x's
    # 64 MiB VMEM; that case needs a K-tiled second grid axis with an online logsumexp.

    Bp = _round_up(B, 8)                  # minimal batch pad (<= 7 rows), not a full copy
    target = _round_up(max(8, min(block_b, Bp)), 8)
    while target > 8 and vmem_bytes(target) > budget:
        target = max(8, ((target // 2) // 8) * 8)
    # v7x has 2 TensorCores: guarantee >= 2 grid steps so both get work (no-op on v5e/v6e).
    if Bp >= 16:
        target = min(target, max(8, ((Bp // 2) // 8) * 8))
    # block_b must be a multiple-of-8 divisor of Bp -> no padding x up to a big multiple.
    block_b = 8 * _largest_divisor_leq(Bp // 8, target // 8)

    vmem_limit = int(min(cap, max(16 << 20, vmem_bytes(block_b) + (8 << 20))))

    if Bp != B:
        xs = jnp.pad(xs, ((0, Bp - B), (0, 0)))

    grid = (Bp // block_b,)
    out_shapes = (
        jax.ShapeDtypeStruct((Bp, Kp), jnp.float32),   # log-probs (padded, f32)
        jax.ShapeDtypeStruct((Bp, Hp), emb_dtype),     # relu(fc(x)) embedding (padded)
    )
    cost = pl.CostEstimate(
        flops=2 * Bp * D * Hp + 2 * Bp * Hp * Kp,
        transcendentals=Bp * Kp,
        bytes_accessed=(Bp * D * x_itemsize + D * Hp * 2 + Hp * Kp * 2
                        + Bp * Kp * 4 + Bp * Hp * emb_itemsize),
    )

    def _call(single_buffer_weights):
        def rspec(shape):
            if single_buffer_weights:
                return pl.BlockSpec(shape, lambda i: (0, 0),
                                    pipeline_mode=pl.Buffered(1))
            return pl.BlockSpec(shape, lambda i: (0, 0))

        return pl.pallas_call(
            cls_kernel,
            out_shape=out_shapes,
            grid_spec=pltpu.PrefetchScalarGridSpec(
                num_scalar_prefetch=0,
                grid=grid,
                in_specs=[
                    pl.BlockSpec((block_b, D), lambda i: (i, 0)),   # x tile (streamed)
                    rspec((D, Hp)),                                 # W1 bf16 (resident)
                    rspec((1, Hp)),                                 # b1 f32  (resident)
                    rspec((Hp, Kp)),                                # W2 bf16 (resident)
                    rspec((1, Kp)),                                 # b2 f32, -1e30 pad
                ],
                out_specs=[
                    pl.BlockSpec((block_b, Kp), lambda i: (i, 0)),
                    pl.BlockSpec((block_b, Hp), lambda i: (i, 0)),
                ],
            ),
            compiler_params=pltpu.CompilerParams(
                dimension_semantics=("parallel",),
                vmem_limit_bytes=vmem_limit),
            cost_estimate=cost,
        )(xs, w1p, b1p, w2p, b2p)

    try:
        logp, emb = _call(True)        # single-buffered resident weights
    except Exception:
        logp, emb = _call(False)       # fallback: default (double-buffered) specs

    # Slice away batch / lane padding in f32, before any downstream dtype narrowing
    # (the -1e30 padded-class columns never leave this function).
    return logp[:B, :K], emb[:B, :H]


def init_cls_params(key, embed_dim, K):
    # Matches CLS._init_weights: weight ~ N(0, 0.01), bias = 0.
    k1, k2 = jax.random.split(key)
    w1 = 0.01 * jax.random.normal(k1, (embed_dim, embed_dim * 2), dtype=jnp.float32)
    b1 = jnp.zeros((embed_dim * 2,), dtype=jnp.float32)
    w2 = 0.01 * jax.random.normal(k2, (embed_dim * 2, K), dtype=jnp.float32)
    b2 = jnp.zeros((K,), dtype=jnp.float32)
    return w1, b1, w2, b2


if __name__ == "__main__":
    embed_dim = 32
    K = 16
    B = 8

    key = jax.random.PRNGKey(0)
    kx, kp = jax.random.split(key)
    x = jax.random.normal(kx, (B, embed_dim), dtype=jnp.float32)
    w1, b1, w2, b2 = init_cls_params(kp, embed_dim, K)

    params = prepare_cls_params(w1, b1, w2, b2)   # one-time pad/cast, out of hot path
    logp, emb = cls_forward(x, params)
    jax.block_until_ready((logp, emb))

    # Reference in plain JAX, mirroring the kernel's bf16-input / f32-accumulate matmuls
    # (the torch module's math, modulo the documented bf16 weight/activation casts).
    xb = x.astype(jnp.bfloat16).astype(jnp.float32)
    w1b = w1.astype(jnp.bfloat16).astype(jnp.float32)
    w2b = w2.astype(jnp.bfloat16).astype(jnp.float32)
    h_ref = jnp.maximum(xb @ w1b + b1[None, :], 0.0)
    logits_ref = h_ref.astype(jnp.bfloat16).astype(jnp.float32) @ w2b + b2[None, :]
    logp_ref = jax.nn.log_softmax(logits_ref, axis=1)

    assert logp.shape == (B, K) and emb.shape == (B, embed_dim * 2)
    assert jnp.allclose(logp, logp_ref, atol=2e-3, rtol=1e-3), "log_softmax mismatch"
    assert jnp.allclose(emb.astype(jnp.float32), h_ref, atol=5e-3, rtol=5e-2), \
        "embedding mismatch"

    print("KERNEL_OK")
</pallas_src>

<mosaic_0001>
module attributes {stable_mosaic.version = 11 : i64} {
  func.func @cls_kernel(%arg0: i32, %arg1: memref<8x32xf32, #tpu.memory_space<vmem>>, %arg2: memref<32x128xbf16, #tpu.memory_space<vmem>>, %arg3: memref<1x128xf32, #tpu.memory_space<vmem>>, %arg4: memref<128x128xbf16, #tpu.memory_space<vmem>>, %arg5: memref<1x128xf32, #tpu.memory_space<vmem>>, %arg6: memref<8x128xf32, #tpu.memory_space<vmem>>, %arg7: memref<8x128xbf16, #tpu.memory_space<vmem>>) attributes {dimension_semantics = [#tpu.dimension_semantics<parallel>], iteration_bounds = array<i64: 1>, scalar_prefetch = 0 : i64, scratch_operands = 0 : i64, tpu.core_type = #tpu.core_type<tc>, window_params = [{transform_indices = @transform_0, window_bounds = array<i64: 8, 32>}, {pipeline_mode = #tpu.pipeline_mode<synchronous>, transform_indices = @transform_1, window_bounds = array<i64: 32, 128>}, {pipeline_mode = #tpu.pipeline_mode<synchronous>, transform_indices = @transform_2, window_bounds = array<i64: 1, 128>}, {pipeline_mode = #tpu.pipeline_mode<synchronous>, transform_indices = @transform_3, window_bounds = array<i64: 128, 128>}, {pipeline_mode = #tpu.pipeline_mode<synchronous>, transform_indices = @transform_4, window_bounds = array<i64: 1, 128>}, {transform_indices = @transform_5, window_bounds = array<i64: 8, 128>}, {transform_indices = @transform_6, window_bounds = array<i64: 8, 128>}]} {
    %c0 = arith.constant 0 : index
    %c0_0 = arith.constant 0 : index
    %0 = vector.load %arg1[%c0, %c0_0] : memref<8x32xf32, #tpu.memory_space<vmem>>, vector<8x32xf32>
    %1 = arith.truncf %0 : vector<8x32xf32> to vector<8x32xbf16>
    %c0_1 = arith.constant 0 : index
    %c0_2 = arith.constant 0 : index
    %2 = vector.load %arg2[%c0_1, %c0_2] : memref<32x128xbf16, #tpu.memory_space<vmem>>, vector<32x128xbf16>
    %cst = arith.constant dense<0.000000e+00> : vector<8x128xf32>
    %3 = tpu.matmul %1, %2, %cst {dimension_numbers = #tpu.dot_dimension_numbers<[1], [0], [0], [1], [0, 0, 1, 1], [], []>} : vector<8x32xbf16>, vector<32x128xbf16>, vector<8x128xf32> -> vector<8x128xf32>
    %c0_3 = arith.constant 0 : index
    %c0_4 = arith.constant 0 : index
    %4 = vector.load %arg3[%c0_3, %c0_4] : memref<1x128xf32, #tpu.memory_space<vmem>>, vector<1x128xf32>
    %5 = vector.broadcast %4 : vector<1x128xf32> to vector<8x128xf32>
    %6 = arith.addf %3, %5 : vector<8x128xf32>
    %cst_5 = arith.constant 0.000000e+00 : f32
    %7 = vector.broadcast %cst_5 : f32 to vector<8x128xf32>
    %8 = arith.maximumf %6, %7 : vector<8x128xf32>
    %9 = arith.truncf %8 : vector<8x128xf32> to vector<8x128xbf16>
    %c0_6 = arith.constant 0 : index
    %c0_7 = arith.constant 0 : index
    %10 = vector.load %arg4[%c0_6, %c0_7] : memref<128x128xbf16, #tpu.memory_space<vmem>>, vector<128x128xbf16>
    %cst_8 = arith.constant dense<0.000000e+00> : vector<8x128xf32>
    %11 = tpu.matmul %9, %10, %cst_8 {dimension_numbers = #tpu.dot_dimension_numbers<[1], [0], [0], [1], [0, 0, 1, 1], [], []>} : vector<8x128xbf16>, vector<128x128xbf16>, vector<8x128xf32> -> vector<8x128xf32>
    %c0_9 = arith.constant 0 : index
    %c0_10 = arith.constant 0 : index
    %12 = vector.load %arg5[%c0_9, %c0_10] : memref<1x128xf32, #tpu.memory_space<vmem>>, vector<1x128xf32>
    %13 = vector.broadcast %12 : vector<1x128xf32> to vector<8x128xf32>
    %14 = arith.addf %11, %13 : vector<8x128xf32>
    %cst_11 = arith.constant dense<0xFF800000> : vector<8xf32>
    %15 = vector.multi_reduction <maximumf>, %14, %cst_11 [1] : vector<8x128xf32> to vector<8xf32>
    %16 = vector.shape_cast %15 : vector<8xf32> to vector<8x1xf32>
    %17 = vector.broadcast %16 : vector<8x1xf32> to vector<8x128xf32>
    %18 = arith.subf %14, %17 : vector<8x128xf32>
    %19 = math.exp %18 : vector<8x128xf32>
    %cst_12 = arith.constant dense<0.000000e+00> : vector<8xf32>
    %20 = vector.multi_reduction <add>, %19, %cst_12 [1] : vector<8x128xf32> to vector<8xf32>
    %21 = vector.shape_cast %20 : vector<8xf32> to vector<8x1xf32>
    %22 = math.log %21 : vector<8x1xf32>
    %23 = vector.broadcast %22 : vector<8x1xf32> to vector<8x128xf32>
    %24 = arith.subf %18, %23 : vector<8x128xf32>
    %c0_13 = arith.constant 0 : index
    %c0_14 = arith.constant 0 : index
    %25 = vector.load %arg6[%c0_13, %c0_14] : memref<8x128xf32, #tpu.memory_space<vmem>>, vector<8x128xf32>
    tpu.vector_store %arg6[%c0_13, %c0_14], %24 {strides = array<i32>} : memref<8x128xf32, #tpu.memory_space<vmem>>, vector<8x128xf32>,
    %26 = arith.truncf %8 : vector<8x128xf32> to vector<8x128xbf16>
    %c0_15 = arith.constant 0 : index
    %c0_16 = arith.constant 0 : index
    %27 = vector.load %arg7[%c0_15, %c0_16] : memref<8x128xbf16, #tpu.memory_space<vmem>>, vector<8x128xbf16>
    tpu.vector_store %arg7[%c0_15, %c0_16], %26 {strides = array<i32>} : memref<8x128xbf16, #tpu.memory_space<vmem>>, vector<8x128xbf16>,
    return
  }
  func.func @transform_0(%arg0: i32) -> (i32, i32) {
    %c0_i32 = arith.constant 0 : i32
    %c0_i32_0 = arith.constant 0 : i32
    return %arg0, %c0_i32 : i32, i32
  }
  func.func @transform_1(%arg0: i32) -> (i32, i32) {
    %c0_i32 = arith.constant 0 : i32
    %c0_i32_0 = arith.constant 0 : i32
    %c0_i32_1 = arith.constant 0 : i32
    return %c0_i32, %c0_i32_0 : i32, i32
  }
  func.func @transform_2(%arg0: i32) -> (i32, i32) {
    %c0_i32 = arith.constant 0 : i32
    %c0_i32_0 = arith.constant 0 : i32
    %c0_i32_1 = arith.constant 0 : i32
    return %c0_i32, %c0_i32_0 : i32, i32
  }
  func.func @transform_3(%arg0: i32) -> (i32, i32) {
    %c0_i32 = arith.constant 0 : i32
    %c0_i32_0 = arith.constant 0 : i32
    %c0_i32_1 = arith.constant 0 : i32
    return %c0_i32, %c0_i32_0 : i32, i32
  }
  func.func @transform_4(%arg0: i32) -> (i32, i32) {
    %c0_i32 = arith.constant 0 : i32
    %c0_i32_0 = arith.constant 0 : i32
    %c0_i32_1 = arith.constant 0 : i32
    return %c0_i32, %c0_i32_0 : i32, i32
  }
  func.func @transform_5(%arg0: i32) -> (i32, i32) {
    %c0_i32 = arith.constant 0 : i32
    %c0_i32_0 = arith.constant 0 : i32
    return %arg0, %c0_i32 : i32, i32
  }
  func.func @transform_6(%arg0: i32) -> (i32, i32) {
    %c0_i32 = arith.constant 0 : i32
    %c0_i32_0 = arith.constant 0 : i32
    return %arg0, %c0_i32 : i32, i32
  }
}

module attributes {stable_mosaic.version = 11 : i64} {
  func.func @cls_kernel(%arg0: i32, %arg1: memref<8x32xf32, #tpu.memory_space<vmem>>, %arg2: memref<32x128xbf16, #tpu.memory_space<vmem>>, %arg3: memref<1x128xf32, #tpu.memory_space<vmem>>, %arg4: memref<128x128xbf16, #tpu.memory_space<vmem>>, %arg5: memref<1x128xf32, #tpu.memory_space<vmem>>, %arg6: memref<8x128xf32, #tpu.memory_space<vmem>>, %arg7: memref<8x128xbf16, #tpu.memory_space<vmem>>) attributes {dimension_semantics = [#tpu.dimension_semantics<parallel>], iteration_bounds = array<i64: 1>, scalar_prefetch = 0 : i64, scratch_operands = 0 : i64, tpu.core_type = #tpu.core_type<tc>, window_params = [{transform_indices = @transform_0, window_bounds = array<i64: 8, 32>}, {pipeline_mode = #tpu.pipeline_mode<synchronous>, transform_indices = @transform_1, window_bounds = array<i64: 32, 128>}, {pipeline_mode = #tpu.pipeline_mode<synchronous>, transform_indices = @transform_2, window_bounds = array<i64: 1, 128>}, {pipeline_mode = #tpu.pipeline_mode<synchronous>, transform_indices = @transform_3, window_bounds = array<i64: 128, 128>}, {pipeline_mode = #tpu.pipeline_mode<synchronous>, transform_indices = @transform_4, window_bounds = array<i64: 1, 128>}, {transform_indices = @transform_5, window_bounds = array<i64: 8, 128>}, {transform_indices = @transform_6, window_bounds = array<i64: 8, 128>}]} {
    %c0 = arith.constant 0 : index
    %c0_0 = arith.constant 0 : index
    %0 = vector.load %arg1[%c0, %c0_0] : memref<8x32xf32, #tpu.memory_space<vmem>>, vector<8x32xf32>
    %1 = arith.truncf %0 : vector<8x32xf32> to vector<8x32xbf16>
    %c0_1 = arith.constant 0 : index
    %c0_2 = arith.constant 0 : index
    %2 = vector.load %arg2[%c0_1, %c0_2] : memref<32x128xbf16, #tpu.memory_space<vmem>>, vector<32x128xbf16>
    %cst = arith.constant dense<0.000000e+00> : vector<8x128xf32>
    %3 = tpu.matmul %1, %2, %cst {dimension_numbers = #tpu.dot_dimension_numbers<[1], [0], [0], [1], [0, 0, 1, 1], [], []>} : vector<8x32xbf16>, vector<32x128xbf16>, vector<8x128xf32> -> vector<8x128xf32>
    %c0_3 = arith.constant 0 : index
    %c0_4 = arith.constant 0 : index
    %4 = vector.load %arg3[%c0_3, %c0_4] : memref<1x128xf32, #tpu.memory_space<vmem>>, vector<1x128xf32>
    %5 = vector.broadcast %4 : vector<1x128xf32> to vector<8x128xf32>
    %6 = arith.addf %3, %5 : vector<8x128xf32>
    %cst_5 = arith.constant 0.000000e+00 : f32
    %7 = vector.broadcast %cst_5 : f32 to vector<8x128xf32>
    %8 = arith.maximumf %6, %7 : vector<8x128xf32>
    %9 = arith.truncf %8 : vector<8x128xf32> to vector<8x128xbf16>
    %c0_6 = arith.constant 0 : index
    %c0_7 = arith.constant 0 : index
    %10 = vector.load %arg4[%c0_6, %c0_7] : memref<128x128xbf16, #tpu.memory_space<vmem>>, vector<128x128xbf16>
    %cst_8 = arith.constant dense<0.000000e+00> : vector<8x128xf32>
    %11 = tpu.matmul %9, %10, %cst_8 {dimension_numbers = #tpu.dot_dimension_numbers<[1], [0], [0], [1], [0, 0, 1, 1], [], []>} : vector<8x128xbf16>, vector<128x128xbf16>, vector<8x128xf32> -> vector<8x128xf32>
    %c0_9 = arith.constant 0 : index
    %c0_10 = arith.constant 0 : index
    %12 = vector.load %arg5[%c0_9, %c0_10] : memref<1x128xf32, #tpu.memory_space<vmem>>, vector<1x128xf32>
    %13 = vector.broadcast %12 : vector<1x128xf32> to vector<8x128xf32>
    %14 = arith.addf %11, %13 : vector<8x128xf32>
    %cst_11 = arith.constant dense<0xFF800000> : vector<8xf32>
    %15 = vector.multi_reduction <maximumf>, %14, %cst_11 [1] : vector<8x128xf32> to vector<8xf32>
    %16 = vector.shape_cast %15 : vector<8xf32> to vector<8x1xf32>
    %17 = vector.broadcast %16 : vector<8x1xf32> to vector<8x128xf32>
    %18 = arith.subf %14, %17 : vector<8x128xf32>
    %19 = math.exp %18 : vector<8x128xf32>
    %cst_12 = arith.constant dense<0.000000e+00> : vector<8xf32>
    %20 = vector.multi_reduction <add>, %19, %cst_12 [1] : vector<8x128xf32> to vector<8xf32>
    %21 = vector.shape_cast %20 : vector<8xf32> to vector<8x1xf32>
    %22 = math.log %21 : vector<8x1xf32>
    %23 = vector.broadcast %22 : vector<8x1xf32> to vector<8x128xf32>
    %24 = arith.subf %18, %23 : vector<8x128xf32>
    %c0_13 = arith.constant 0 : index
    %c0_14 = arith.constant 0 : index
    %25 = vector.load %arg6[%c0_13, %c0_14] : memref<8x128xf32, #tpu.memory_space<vmem>>, vector<8x128xf32>
    tpu.vector_store %arg6[%c0_13, %c0_14], %24 {strides = array<i32>} : memref<8x128xf32, #tpu.memory_space<vmem>>, vector<8x128xf32>,
    %26 = arith.truncf %8 : vector<8x128xf32> to vector<8x128xbf16>
    %c0_15 = arith.constant 0 : index
    %c0_16 = arith.constant 0 : index
    %27 = vector.load %arg7[%c0_15, %c0_16] : memref<8x128xbf16, #tpu.memory_space<vmem>>, vector<8x128xbf16>
    tpu.vector_store %arg7[%c0_15, %c0_16], %26 {strides = array<i32>} : memref<8x128xbf16, #tpu.memory_space<vmem>>, vector<8x128xbf16>,
    return
  }
  func.func @transform_0(%arg0: i32) -> (i32, i32) {
    %c0_i32 = arith.constant 0 : i32
    %c0_i32_0 = arith.constant 0 : i32
    return %arg0, %c0_i32 : i32, i32
  }
  func.func @transform_1(%arg0: i32) -> (i32, i32) {
    %c0_i32 = arith.constant 0 : i32
    %c0_i32_0 = arith.constant 0 : i32
    %c0_i32_1 = arith.constant 0 : i32
    return %c0_i32, %c0_i32_0 : i32, i32
  }
  func.func @transform_2(%arg0: i32) -> (i32, i32) {
    %c0_i32 = arith.constant 0 : i32
    %c0_i32_0 = arith.constant 0 : i32
    %c0_i32_1 = arith.constant 0 : i32
    return %c0_i32, %c0_i32_0 : i32, i32
  }
  func.func @transform_3(%arg0: i32) -> (i32, i32) {
    %c0_i32 = arith.constant 0 : i32
    %c0_i32_0 = arith.constant 0 : i32
    %c0_i32_1 = arith.constant 0 : i32
    return %c0_i32, %c0_i32_0 : i32, i32
  }
  func.func @transform_4(%arg0: i32) -> (i32, i32) {
    %c0_i32 = arith.constant 0 : i32
    %c0_i32_0 = arith.constant 0 : i32
    %c0_i32_1 = arith.constant 0 : i32
    return %c0_i32, %c0_i32_0 : i32, i32
  }
  func.func @transform_5(%arg0: i32) -> (i32, i32) {
    %c0_i32 = arith.constant 0 : i32
    %c0_i32_0 = arith.constant 0 : i32
    return %arg0, %c0_i32 : i32, i32
  }
  func.func @transform_6(%arg0: i32) -> (i32, i32) {
    %c0_i32 = arith.constant 0 : i32
    %c0_i32_0 = arith.constant 0 : i32
    return %arg0, %c0_i32 : i32, i32
  }
}

</mosaic_0001>

<llo_original>
// kernel: tpu_custom_call.1
$region0: #{tpu_custom_call.1}
  #allocation0 [shape = 'u32[]', space=smem, size = 0x4, offset = 0x4, fixed_abs, tag = 'smem constant byte address 0x4 - core index']
  #allocation1 [shape = 'u32[72,128]{1,0:T(1,128)}', space=vmem, size = 0x9000, scoped, tag = 'internal scratch']
  %s0 = inlined_call_operand.hbm [shape: f32[8,32], index: 0, kind: input, shape index: {}]
  %s1 = inlined_call_operand.hbm [shape: bf16[32,128], index: 1, kind: input, shape index: {}]
  %s2 = inlined_call_operand.vmem [shape: f32[1,128], index: 2, kind: input, shape index: {}]
  %s3 = inlined_call_operand.hbm [shape: bf16[128,128], index: 3, kind: input, shape index: {}]
  %s4 = inlined_call_operand.vmem [shape: f32[1,128], index: 4, kind: input, shape index: {}]
  %s5 = inlined_call_operand.hbm [shape: f32[8,128], index: 5, kind: output, shape index: {0}]
  %s6 = inlined_call_operand.hbm [shape: bf16[8,128], index: 6, kind: output, shape index: {1}]
  %7 = xla_tuple %s5, %s6
  %s8 = sld [smem:[#allocation0]]
  $region50: #{tpu_custom_call.1} parent=0
    _
  %s10 = ssub.s32 1, %s8
  %s11 = scalar_select 0, %s10, %s8
  $region1: #{tpu_custom_call.1} parent=0
    #allocation2 [shape = 'u8[4096]{0}', space=vmem, size = 0x1000, scoped, tag = 'input window, operand 0, single buffered']
    #allocation3 [shape = 's32[1]{0}', space=sflag, size = 0x4, scoped, tag = 'scoped memory for tpu_custom_call.1']
    #allocation4 [shape = 's32[1]{0}', space=sflag, size = 0x4, scoped, tag = 'scoped memory for tpu_custom_call.1']
    #allocation5 [shape = 'u8[8192]{0}', space=vmem, size = 0x2000, scoped, tag = 'input window, operand 1, single buffered']
    #allocation6 [shape = 's32[1]{0}', space=sflag, size = 0x4, scoped, tag = 'scoped memory for tpu_custom_call.1']
    #allocation7 [shape = 'u8[32768]{0}', space=vmem, size = 0x8000, scoped, tag = 'input window, operand 3, single buffered']
    #allocation8 [shape = 'u8[4096]{0}', space=vmem, size = 0x1000, scoped, tag = 'output window, operand 0, single buffered']
    #allocation9 [shape = 'u8[2048]{0}', space=vmem, size = 0x800, scoped, tag = 'output window, operand 1, single buffered']
    #allocation10 [shape = 's32[1]{0}', space=sflag, size = 0x4, scoped, tag = 'scoped memory for tpu_custom_call.1']
    %12 = vsyncpa [#allocation3], 0
    %13 = vsyncpa [#allocation6], 0
    %14 = vsyncpa [#allocation4], 0
    %15 = vsyncpa [#allocation10], 0
    // Predicated region
    $region2: #{tpu_custom_call.1} parent=1 // pred_check
      _
    $region3: #{tpu_custom_call.1} parent=1 // pred_check_branch
      %17 = sbr.rel (0) target = $region5
    $region4: #{tpu_custom_call.1} parent=1 // pred_region
      %19 = vsyncadd [#allocation3], 0
      %s21 = sshll.u32 %s0, 4
      %s22 = int_to_ptr.hbm [resolvable:$true] %s21
      %s23 = sshll.u32 [#allocation2], 4
      %s24 = int_to_ptr.vmem [resolvable:$true] %s23
      %26 = dma.hbm_to_vmem [thread:$0]  %s22, 128, %s24, [#allocation3]
    $region5: #{tpu_custom_call.1} parent=1 // pred_fallthru
      _
    // Predicated region
    $region6: #{tpu_custom_call.1} parent=1 // pred_check
      _
    $region7: #{tpu_custom_call.1} parent=1 // pred_check_branch
      %28 = sbr.rel (0) target = $region9
    $region8: #{tpu_custom_call.1} parent=1 // pred_region
      %30 = vsyncadd [#allocation6], 0
      %s31 = sshll.u32 %s1, 4
      %s32 = int_to_ptr.hbm [resolvable:$true] %s31
      %s33 = sshll.u32 [#allocation5], 4
      %s34 = int_to_ptr.vmem [resolvable:$true] %s33
      %39 = dma.hbm_to_vmem [thread:$0]  %s32, 256, %s34, [#allocation6], 64, 64, 4
    $region9: #{tpu_custom_call.1} parent=1 // pred_fallthru
      _
    // Predicated region
    $region10: #{tpu_custom_call.1} parent=1 // pred_check
      _
    $region11: #{tpu_custom_call.1} parent=1 // pred_check_branch
      %41 = sbr.rel (0) target = $region13
    $region12: #{tpu_custom_call.1} parent=1 // pred_region
      _
    $region13: #{tpu_custom_call.1} parent=1 // pred_fallthru
      _
    // Predicated region
    $region14: #{tpu_custom_call.1} parent=1 // pred_check
      _
    $region15: #{tpu_custom_call.1} parent=1 // pred_check_branch
      %43 = sbr.rel (0) target = $region17
    $region16: #{tpu_custom_call.1} parent=1 // pred_region
      %45 = vsyncadd [#allocation6], 0
      %s46 = sshll.u32 %s3, 4
      %s47 = int_to_ptr.hbm [resolvable:$true] %s46
      %s48 = sshll.u32 [#allocation7], 4
      %s49 = int_to_ptr.vmem [resolvable:$true] %s48
      %54 = dma.hbm_to_vmem [thread:$0]  %s47, 1024, %s49, [#allocation6], 64, 64, 4
    $region17: #{tpu_custom_call.1} parent=1 // pred_fallthru
      _
    // Predicated region
    $region18: #{tpu_custom_call.1} parent=1 // pred_check
      _
    $region19: #{tpu_custom_call.1} parent=1 // pred_check_branch
      %56 = sbr.rel (0) target = $region21
    $region20: #{tpu_custom_call.1} parent=1 // pred_region
      _
    $region21: #{tpu_custom_call.1} parent=1 // pred_fallthru
      _
    // Predicated region
    $region22: #{tpu_custom_call.1} parent=1 // pred_check
      _
    $region23: #{tpu_custom_call.1} parent=1 // pred_check_branch
      %58 = sbr.rel (0) target = $region25
    $region24: #{tpu_custom_call.1} parent=1 // pred_region
      %60 = dma.done [#allocation3], 128
    $region25: #{tpu_custom_call.1} parent=1 // pred_fallthru
      _
    // Predicated region
    $region26: #{tpu_custom_call.1} parent=1 // pred_check
      _
    $region27: #{tpu_custom_call.1} parent=1 // pred_check_branch
      %62 = sbr.rel (0) target = $region29
    $region28: #{tpu_custom_call.1} parent=1 // pred_region
      %64 = dma.done [#allocation6], 256
    $region29: #{tpu_custom_call.1} parent=1 // pred_fallthru
      _
    // Predicated region
    $region30: #{tpu_custom_call.1} parent=1 // pred_check
      _
    $region31: #{tpu_custom_call.1} parent=1 // pred_check_branch
      %66 = sbr.rel (0) target = $region33
    $region32: #{tpu_custom_call.1} parent=1 // pred_region
      %68 = dma.done [#allocation6], 1024
    $region33: #{tpu_custom_call.1} parent=1 // pred_fallthru
      _
    %v70 = vld [vmem:[#allocation2] sm:$0xff]
    %v71 = vpack.c.bf16 %v70, %v70
    %v72 = vld [vmem:[#allocation5] sm:$0xf]
    %v73 = vld [vmem:[#allocation5 + $0x4] sm:$0xf]
    %v74 = vld [vmem:[#allocation5 + $0x8] sm:$0xf]
    %v75 = vld [vmem:[#allocation5 + $0xc] sm:$0xf]
    %v76 = vld [vmem:[%s2] sm:$0x1]
    %v78 = vperm.slane %v76, 0
    %v84 = vunpack.c.l.b16 %v72
    %v85 = vunpack.c.l.b16 %v73
    %v86 = vunpack.c.l.b16 %v74
    %v87 = vunpack.c.l.b16 %v75
    %v88 = vpack.c.b16 %v85, %v84
    %v89 = vpack.c.b16 %v87, %v86
    %vm92 = vcmask 261120
    %v94 = vsel %vm92, %v71, 0
    %96 = vmatpush.bf16.msra.mxu0 0
    %97 = vmatpush.bf16.msra.mxu0 0
    %98 = vmatpush.bf16.msra.mxu0 0
    %99 = vmatpush.bf16.msra.mxu0 0
    %100 = vmatpush.bf16.msra.mxu0 0
    %101 = vmatpush.bf16.msra.mxu0 0
    %102 = vmatpush.bf16.msra.mxu0 %v89
    %103 = vmatpush.bf16.msra.mxu0 %v88
    %104 = vmatmul.bf16.gmra.mxu0 %v94
    %v105 = vpop.f32.mrf.mxu0
    %v106 = vadd.f32 %v78, %v105
    %v107 = vpop.f32.mrf.mxu0
    %108 = vdwg.mxu0
    %v109 = vmax.f32 %v106, 0.0
    %v110 = vpack.c.bf16 %v109, %v109
    %v111 = vld [vmem:[#allocation7] sm:$0xf]
    %v112 = vld [vmem:[#allocation7 + $0x4] sm:$0xf]
    %v113 = vld [vmem:[#allocation7 + $0x8] sm:$0xf]
    %v114 = vld [vmem:[#allocation7 + $0xc] sm:$0xf]
    %v115 = vld [vmem:[#allocation7 + $0x10] sm:$0xf]
    %v116 = vld [vmem:[#allocation7 + $0x14] sm:$0xf]
    %v117 = vld [vmem:[#allocation7 + $0x18] sm:$0xf]
    %v118 = vld [vmem:[#allocation7 + $0x1c] sm:$0xf]
    %v119 = vld [vmem:[#allocation7 + $0x20] sm:$0xf]
    %v120 = vld [vmem:[#allocation7 + $0x24] sm:$0xf]
    %v121 = vld [vmem:[#allocation7 + $0x28] sm:$0xf]
    %v122 = vld [vmem:[#allocation7 + $0x2c] sm:$0xf]
    %v123 = vld [vmem:[#allocation7 + $0x30] sm:$0xf]
    %v124 = vld [vmem:[#allocation7 + $0x34] sm:$0xf]
    %v125 = vld [vmem:[#allocation7 + $0x38] sm:$0xf]
    %v126 = vld [vmem:[#allocation7 + $0x3c] sm:$0xf]
    %v127 = vld [vmem:[%s4] sm:$0x1]
    %v129 = vperm.slane %v127, 0
    %v147 = vunpack.c.l.b16 %v111
    %v148 = vunpack.c.l.b16 %v112
    %v149 = vunpack.c.l.b16 %v113
    %v150 = vunpack.c.l.b16 %v114
    %v151 = vunpack.c.l.b16 %v115
    %v152 = vunpack.c.l.b16 %v116
    %v153 = vunpack.c.l.b16 %v117
    %v154 = vunpack.c.l.b16 %v118
    %v155 = vunpack.c.l.b16 %v119
    %v156 = vunpack.c.l.b16 %v120
    %v157 = vunpack.c.l.b16 %v121
    %v158 = vunpack.c.l.b16 %v122
    %v159 = vunpack.c.l.b16 %v123
    %v160 = vunpack.c.l.b16 %v124
    %v161 = vunpack.c.l.b16 %v125
    %v162 = vunpack.c.l.b16 %v126
    %v163 = vpack.c.b16 %v148, %v147
    %v164 = vpack.c.b16 %v150, %v149
    %v165 = vpack.c.b16 %v152, %v151
    %v166 = vpack.c.b16 %v154, %v153
    %v167 = vpack.c.b16 %v156, %v155
    %v168 = vpack.c.b16 %v158, %v157
    %v169 = vpack.c.b16 %v160, %v159
    %v170 = vpack.c.b16 %v162, %v161
    %179 = vmatpush.bf16.msra.mxu0 %v170
    %180 = vmatpush.bf16.msra.mxu0 %v169
    %181 = vmatpush.bf16.msra.mxu0 %v168
    %182 = vmatpush.bf16.msra.mxu0 %v167
    %183 = vmatpush.bf16.msra.mxu0 %v166
    %184 = vmatpush.bf16.msra.mxu0 %v165
    %185 = vmatpush.bf16.msra.mxu0 %v164
    %186 = vmatpush.bf16.msra.mxu0 %v163
    %187 = vmatmul.bf16.gmra.mxu0 %v110
    %v188 = vpop.f32.mrf.mxu0
    %v189 = vadd.f32 %v129, %v188
    %v190 = vpop.f32.mrf.mxu0
    %191 = vdwg.mxu0
    %192 = vmax.xlane.f32.xlu0 %v189
    %v193 = vpop.xlane.xlu0 %192
    %v194 = vsub.f32 %v189, %v193
    %v195 = vmul.f32 %v194, 1.442695
    %v196 = vpow.pop %v195
    %197 = vadd.xlane.f32.xlu0 %v196
    %v198 = vpop.xlane.xlu0 %197
    %v199 = vlog2.pop %v198
    %v200 = vmul.f32 %v199, 0.6931472
    %v201 = vsub.f32 %v194, %v200
    %202 = vst [vmem:[#allocation8] sm:$0xff] %v201
    %203 = vst [vmem:[#allocation9] sm:$0xf] %v110
    // Predicated region
    $region34: #{tpu_custom_call.1} parent=1 // pred_check
      _
    $region35: #{tpu_custom_call.1} parent=1 // pred_check_branch
      %205 = sbr.rel (0) target = $region37
    $region36: #{tpu_custom_call.1} parent=1 // pred_region
      %207 = vsyncadd [#allocation4], 0
      %s209 = sshll.u32 [#allocation8], 4
      %s210 = int_to_ptr.vmem [resolvable:$true] %s209
      %s211 = sshll.u32 %s5, 4
      %s212 = int_to_ptr.hbm [resolvable:$true] %s211
      %214 = dma.vmem_to_hbm [thread:$0]  %s210, 128, %s212, [#allocation4]
    $region37: #{tpu_custom_call.1} parent=1 // pred_fallthru
      _
    // Predicated region
    $region38: #{tpu_custom_call.1} parent=1 // pred_check
      _
    $region39: #{tpu_custom_call.1} parent=1 // pred_check_branch
      %216 = sbr.rel (0) target = $region41
    $region40: #{tpu_custom_call.1} parent=1 // pred_region
      %218 = vsyncadd [#allocation10], 0
      %s220 = sshll.u32 [#allocation9], 4
      %s221 = int_to_ptr.vmem [resolvable:$true] %s220
      %s222 = sshll.u32 %s6, 4
      %s223 = int_to_ptr.hbm [resolvable:$true] %s222
      %225 = dma.vmem_to_hbm [thread:$0]  %s221, 64, %s223, [#allocation10]
    $region41: #{tpu_custom_call.1} parent=1 // pred_fallthru
      _
    // Predicated region
    $region42: #{tpu_custom_call.1} parent=1 // pred_check
      _
    $region43: #{tpu_custom_call.1} parent=1 // pred_check_branch
      %227 = sbr.rel (0) target = $region45
    $region44: #{tpu_custom_call.1} parent=1 // pred_region
      %229 = dma.done [#allocation4], 128
    $region45: #{tpu_custom_call.1} parent=1 // pred_fallthru
      _
    // Predicated region
    $region46: #{tpu_custom_call.1} parent=1 // pred_check
      _
    $region47: #{tpu_custom_call.1} parent=1 // pred_check_branch
      %231 = sbr.rel (0) target = $region49
    $region48: #{tpu_custom_call.1} parent=1 // pred_region
      %233 = dma.done [#allocation10], 64
    $region49: #{tpu_custom_call.1} parent=1 // pred_fallthru
      _
    %234 = vsyncpa [#allocation3], 1
    %235 = vsyncpa [#allocation6], 1
    %236 = vsyncpa [#allocation4], 1
    %237 = vsyncpa [#allocation10], 1

// kernel: tpu_custom_call.1
$region0: #{tpu_custom_call.1}
  #allocation0 [shape = 'u32[]', space=smem, size = 0x4, offset = 0x4, fixed_abs, tag = 'smem constant byte address 0x4 - core index']
  #allocation1 [shape = 'u32[72,128]{1,0:T(1,128)}', space=vmem, size = 0x9000, scoped, tag = 'internal scratch']
  %s0 = inlined_call_operand.hbm [shape: f32[8,32], index: 0, kind: input, shape index: {}]
  %s1 = inlined_call_operand.hbm [shape: bf16[32,128], index: 1, kind: input, shape index: {}]
  %s2 = inlined_call_operand.vmem [shape: f32[1,128], index: 2, kind: input, shape index: {}]
  %s3 = inlined_call_operand.hbm [shape: bf16[128,128], index: 3, kind: input, shape index: {}]
  %s4 = inlined_call_operand.vmem [shape: f32[1,128], index: 4, kind: input, shape index: {}]
  %s5 = inlined_call_operand.hbm [shape: f32[8,128], index: 5, kind: output, shape index: {0}]
  %s6 = inlined_call_operand.hbm [shape: bf16[8,128], index: 6, kind: output, shape index: {1}]
  %7 = xla_tuple %s5, %s6
  %s8 = sld [smem:[#allocation0]]
  $region50: #{tpu_custom_call.1} parent=0
    _
  %s10 = ssub.s32 1, %s8
  %s11 = scalar_select 0, %s10, %s8
  $region1: #{tpu_custom_call.1} parent=0
    #allocation2 [shape = 'u8[4096]{0}', space=vmem, size = 0x1000, scoped, tag = 'input window, operand 0, single buffered']
    #allocation3 [shape = 's32[1]{0}', space=sflag, size = 0x4, scoped, tag = 'scoped memory for tpu_custom_call.1']
    #allocation4 [shape = 's32[1]{0}', space=sflag, size = 0x4, scoped, tag = 'scoped memory for tpu_custom_call.1']
    #allocation5 [shape = 'u8[8192]{0}', space=vmem, size = 0x2000, scoped, tag = 'input window, operand 1, single buffered']
    #allocation6 [shape = 's32[1]{0}', space=sflag, size = 0x4, scoped, tag = 'scoped memory for tpu_custom_call.1']
    #allocation7 [shape = 'u8[32768]{0}', space=vmem, size = 0x8000, scoped, tag = 'input window, operand 3, single buffered']
    #allocation8 [shape = 'u8[4096]{0}', space=vmem, size = 0x1000, scoped, tag = 'output window, operand 0, single buffered']
    #allocation9 [shape = 'u8[2048]{0}', space=vmem, size = 0x800, scoped, tag = 'output window, operand 1, single buffered']
    #allocation10 [shape = 's32[1]{0}', space=sflag, size = 0x4, scoped, tag = 'scoped memory for tpu_custom_call.1']
    %12 = vsyncpa [#allocation3], 0
    %13 = vsyncpa [#allocation6], 0
    %14 = vsyncpa [#allocation4], 0
    %15 = vsyncpa [#allocation10], 0
    // Predicated region
    $region2: #{tpu_custom_call.1} parent=1 // pred_check
      _
    $region3: #{tpu_custom_call.1} parent=1 // pred_check_branch
      %17 = sbr.rel (0) target = $region5
    $region4: #{tpu_custom_call.1} parent=1 // pred_region
      %19 = vsyncadd [#allocation3], 0
      %s21 = sshll.u32 %s0, 4
      %s22 = int_to_ptr.hbm [resolvable:$true] %s21
      %s23 = sshll.u32 [#allocation2], 4
      %s24 = int_to_ptr.vmem [resolvable:$true] %s23
      %26 = dma.hbm_to_vmem [thread:$0]  %s22, 128, %s24, [#allocation3]
    $region5: #{tpu_custom_call.1} parent=1 // pred_fallthru
      _
    // Predicated region
    $region6: #{tpu_custom_call.1} parent=1 // pred_check
      _
    $region7: #{tpu_custom_call.1} parent=1 // pred_check_branch
      %28 = sbr.rel (0) target = $region9
    $region8: #{tpu_custom_call.1} parent=1 // pred_region
      %30 = vsyncadd [#allocation6], 0
      %s31 = sshll.u32 %s1, 4
      %s32 = int_to_ptr.hbm [resolvable:$true] %s31
      %s33 = sshll.u32 [#allocation5], 4
      %s34 = int_to_ptr.vmem [resolvable:$true] %s33
      %39 = dma.hbm_to_vmem [thread:$0]  %s32, 256, %s34, [#allocation6], 64, 64, 4
    $region9: #{tpu_custom_call.1} parent=1 // pred_fallthru
      _
    // Predicated region
    $region10: #{tpu_custom_call.1} parent=1 // pred_check
      _
    $region11: #{tpu_custom_call.1} parent=1 // pred_check_branch
      %41 = sbr.rel (0) target = $region13
    $region12: #{tpu_custom_call.1} parent=1 // pred_region
      _
    $region13: #{tpu_custom_call.1} parent=1 // pred_fallthru
      _
    // Predicated region
    $region14: #{tpu_custom_call.1} parent=1 // pred_check
      _
    $region15: #{tpu_custom_call.1} parent=1 // pred_check_branch
      %43 = sbr.rel (0) target = $region17
    $region16: #{tpu_custom_call.1} parent=1 // pred_region
      %45 = vsyncadd [#allocation6], 0
      %s46 = sshll.u32 %s3, 4
      %s47 = int_to_ptr.hbm [resolvable:$true] %s46
      %s48 = sshll.u32 [#allocation7], 4
      %s49 = int_to_ptr.vmem [resolvable:$true] %s48
      %54 = dma.hbm_to_vmem [thread:$0]  %s47, 1024, %s49, [#allocation6], 64, 64, 4
    $region17: #{tpu_custom_call.1} parent=1 // pred_fallthru
      _
    // Predicated region
    $region18: #{tpu_custom_call.1} parent=1 // pred_check
      _
    $region19: #{tpu_custom_call.1} parent=1 // pred_check_branch
      %56 = sbr.rel (0) target = $region21
    $region20: #{tpu_custom_call.1} parent=1 // pred_region
      _
    $region21: #{tpu_custom_call.1} parent=1 // pred_fallthru
      _
    // Predicated region
    $region22: #{tpu_custom_call.1} parent=1 // pred_check
      _
    $region23: #{tpu_custom_call.1} parent=1 // pred_check_branch
      %58 = sbr.rel (0) target = $region25
    $region24: #{tpu_custom_call.1} parent=1 // pred_region
      %60 = dma.done [#allocation3], 128
    $region25: #{tpu_custom_call.1} parent=1 // pred_fallthru
      _
    // Predicated region
    $region26: #{tpu_custom_call.1} parent=1 // pred_check
      _
    $region27: #{tpu_custom_call.1} parent=1 // pred_check_branch
      %62 = sbr.rel (0) target = $region29
    $region28: #{tpu_custom_call.1} parent=1 // pred_region
      %64 = dma.done [#allocation6], 256
    $region29: #{tpu_custom_call.1} parent=1 // pred_fallthru
      _
    // Predicated region
    $region30: #{tpu_custom_call.1} parent=1 // pred_check
      _
    $region31: #{tpu_custom_call.1} parent=1 // pred_check_branch
      %66 = sbr.rel (0) target = $region33
    $region32: #{tpu_custom_call.1} parent=1 // pred_region
      %68 = dma.done [#allocation6], 1024
    $region33: #{tpu_custom_call.1} parent=1 // pred_fallthru
      _
    %v70 = vld [vmem:[#allocation2] sm:$0xff]
    %v71 = vpack.c.bf16 %v70, %v70
    %v72 = vld [vmem:[#allocation5] sm:$0xf]
    %v73 = vld [vmem:[#allocation5 + $0x4] sm:$0xf]
    %v74 = vld [vmem:[#allocation5 + $0x8] sm:$0xf]
    %v75 = vld [vmem:[#allocation5 + $0xc] sm:$0xf]
    %v76 = vld [vmem:[%s2] sm:$0x1]
    %v78 = vperm.slane %v76, 0
    %v84 = vunpack.c.l.b16 %v72
    %v85 = vunpack.c.l.b16 %v73
    %v86 = vunpack.c.l.b16 %v74
    %v87 = vunpack.c.l.b16 %v75
    %v88 = vpack.c.b16 %v85, %v84
    %v89 = vpack.c.b16 %v87, %v86
    %vm92 = vcmask 261120
    %v94 = vsel %vm92, %v71, 0
    %96 = vmatpush.bf16.msra.mxu0 0
    %97 = vmatpush.bf16.msra.mxu0 0
    %98 = vmatpush.bf16.msra.mxu0 0
    %99 = vmatpush.bf16.msra.mxu0 0
    %100 = vmatpush.bf16.msra.mxu0 0
    %101 = vmatpush.bf16.msra.mxu0 0
    %102 = vmatpush.bf16.msra.mxu0 %v89
    %103 = vmatpush.bf16.msra.mxu0 %v88
    %104 = vmatmul.bf16.gmra.mxu0 %v94
    %v105 = vpop.f32.mrf.mxu0
    %v106 = vadd.f32 %v78, %v105
    %v107 = vpop.f32.mrf.mxu0
    %108 = vdwg.mxu0
    %v109 = vmax.f32 %v106, 0.0
    %v110 = vpack.c.bf16 %v109, %v109
    %v111 = vld [vmem:[#allocation7] sm:$0xf]
    %v112 = vld [vmem:[#allocation7 + $0x4] sm:$0xf]
    %v113 = vld [vmem:[#allocation7 + $0x8] sm:$0xf]
    %v114 = vld [vmem:[#allocation7 + $0xc] sm:$0xf]
    %v115 = vld [vmem:[#allocation7 + $0x10] sm:$0xf]
    %v116 = vld [vmem:[#allocation7 + $0x14] sm:$0xf]
    %v117 = vld [vmem:[#allocation7 + $0x18] sm:$0xf]
    %v118 = vld [vmem:[#allocation7 + $0x1c] sm:$0xf]
    %v119 = vld [vmem:[#allocation7 + $0x20] sm:$0xf]
    %v120 = vld [vmem:[#allocation7 + $0x24] sm:$0xf]
    %v121 = vld [vmem:[#allocation7 + $0x28] sm:$0xf]
    %v122 = vld [vmem:[#allocation7 + $0x2c] sm:$0xf]
    %v123 = vld [vmem:[#allocation7 + $0x30] sm:$0xf]
    %v124 = vld [vmem:[#allocation7 + $0x34] sm:$0xf]
    %v125 = vld [vmem:[#allocation7 + $0x38] sm:$0xf]
    %v126 = vld [vmem:[#allocation7 + $0x3c] sm:$0xf]
    %v127 = vld [vmem:[%s4] sm:$0x1]
    %v129 = vperm.slane %v127, 0
    %v147 = vunpack.c.l.b16 %v111
    %v148 = vunpack.c.l.b16 %v112
    %v149 = vunpack.c.l.b16 %v113
    %v150 = vunpack.c.l.b16 %v114
    %v151 = vunpack.c.l.b16 %v115
    %v152 = vunpack.c.l.b16 %v116
    %v153 = vunpack.c.l.b16 %v117
    %v154 = vunpack.c.l.b16 %v118
    %v155 = vunpack.c.l.b16 %v119
    %v156 = vunpack.c.l.b16 %v120
    %v157 = vunpack.c.l.b16 %v121
    %v158 = vunpack.c.l.b16 %v122
    %v159 = vunpack.c.l.b16 %v123
    %v160 = vunpack.c.l.b16 %v124
    %v161 = vunpack.c.l.b16 %v125
    %v162 = vunpack.c.l.b16 %v126
    %v163 = vpack.c.b16 %v148, %v147
    %v164 = vpack.c.b16 %v150, %v149
    %v165 = vpack.c.b16 %v152, %v151
    %v166 = vpack.c.b16 %v154, %v153
    %v167 = vpack.c.b16 %v156, %v155
    %v168 = vpack.c.b16 %v158, %v157
    %v169 = vpack.c.b16 %v160, %v159
    %v170 = vpack.c.b16 %v162, %v161
    %179 = vmatpush.bf16.msra.mxu0 %v170
    %180 = vmatpush.bf16.msra.mxu0 %v169
    %181 = vmatpush.bf16.msra.mxu0 %v168
    %182 = vmatpush.bf16.msra.mxu0 %v167
    %183 = vmatpush.bf16.msra.mxu0 %v166
    %184 = vmatpush.bf16.msra.mxu0 %v165
    %185 = vmatpush.bf16.msra.mxu0 %v164
    %186 = vmatpush.bf16.msra.mxu0 %v163
    %187 = vmatmul.bf16.gmra.mxu0 %v110
    %v188 = vpop.f32.mrf.mxu0
    %v189 = vadd.f32 %v129, %v188
    %v190 = vpop.f32.mrf.mxu0
    %191 = vdwg.mxu0
    %192 = vmax.xlane.f32.xlu0 %v189
    %v193 = vpop.xlane.xlu0 %192
    %v194 = vsub.f32 %v189, %v193
    %v195 = vmul.f32 %v194, 1.442695
    %v196 = vpow.pop %v195
    %197 = vadd.xlane.f32.xlu0 %v196
    %v198 = vpop.xlane.xlu0 %197
    %v199 = vlog2.pop %v198
    %v200 = vmul.f32 %v199, 0.6931472
    %v201 = vsub.f32 %v194, %v200
    %202 = vst [vmem:[#allocation8] sm:$0xff] %v201
    %203 = vst [vmem:[#allocation9] sm:$0xf] %v110
    // Predicated region
    $region34: #{tpu_custom_call.1} parent=1 // pred_check
      _
    $region35: #{tpu_custom_call.1} parent=1 // pred_check_branch
      %205 = sbr.rel (0) target = $region37
    $region36: #{tpu_custom_call.1} parent=1 // pred_region
      %207 = vsyncadd [#allocation4], 0
      %s209 = sshll.u32 [#allocation8], 4
      %s210 = int_to_ptr.vmem [resolvable:$true] %s209
      %s211 = sshll.u32 %s5, 4
      %s212 = int_to_ptr.hbm [resolvable:$true] %s211
      %214 = dma.vmem_to_hbm [thread:$0]  %s210, 128, %s212, [#allocation4]
    $region37: #{tpu_custom_call.1} parent=1 // pred_fallthru
      _
    // Predicated region
    $region38: #{tpu_custom_call.1} parent=1 // pred_check
      _
    $region39: #{tpu_custom_call.1} parent=1 // pred_check_branch
      %216 = sbr.rel (0) target = $region41
    $region40: #{tpu_custom_call.1} parent=1 // pred_region
      %218 = vsyncadd [#allocation10], 0
      %s220 = sshll.u32 [#allocation9], 4
      %s221 = int_to_ptr.vmem [resolvable:$true] %s220
      %s222 = sshll.u32 %s6, 4
      %s223 = int_to_ptr.hbm [resolvable:$true] %s222
      %225 = dma.vmem_to_hbm [thread:$0]  %s221, 64, %s223, [#allocation10]
    $region41: #{tpu_custom_call.1} parent=1 // pred_fallthru
      _
    // Predicated region
    $region42: #{tpu_custom_call.1} parent=1 // pred_check
      _
    $region43: #{tpu_custom_call.1} parent=1 // pred_check_branch
      %227 = sbr.rel (0) target = $region45
    $region44: #{tpu_custom_call.1} parent=1 // pred_region
      %229 = dma.done [#allocation4], 128
    $region45: #{tpu_custom_call.1} parent=1 // pred_fallthru
      _
    // Predicated region
    $region46: #{tpu_custom_call.1} parent=1 // pred_check
      _
    $region47: #{tpu_custom_call.1} parent=1 // pred_check_branch
      %231 = sbr.rel (0) target = $region49
    $region48: #{tpu_custom_call.1} parent=1 // pred_region
      %233 = dma.done [#allocation10], 64
    $region49: #{tpu_custom_call.1} parent=1 // pred_fallthru
      _
    %234 = vsyncpa [#allocation3], 1
    %235 = vsyncpa [#allocation6], 1
    %236 = vsyncpa [#allocation4], 1
    %237 = vsyncpa [#allocation10], 1

</llo_original>
